<compile_context>
chip_gen: v7x
topology: tpu7x:2x2x1
jax: 0.10.0
libtpu: 0.0.40
codegen_flags: <defaults>
</compile_context>

<pallas_src>
import math

import jax
import jax.numpy as jnp
from jax.experimental import pallas as pl
from jax.experimental.pallas import tpu as pltpu


def _round_up(n, m):
    return ((n + m - 1) // m) * m


def _vmem_working_set(tb, tk, f_pad, c_pad):
    """VMEM bytes needed by the pipelined kernel for one (tb, tk) config."""
    return (2 * tb * tk * 2            # x tile        (bf16, double-buffered)
            + 2 * tk * f_pad * 2       # W1 tile       (bf16, double-buffered)
            + 2 * f_pad * c_pad * 2    # W2 (whole)    (bf16, double-buffered)
            + 2 * f_pad * 4            # b1            (f32,  double-buffered)
            + 2 * c_pad * 4            # b2            (f32,  double-buffered)
            + 2 * tb * c_pad * 4       # output tile   (f32,  double-buffered)
            + tb * f_pad * 4)          # f32 accumulator scratch (single)


def _choose_tiles(b_pad, f_pad, c_pad, budget_bytes):
    """Pick (tb, tk).  Prefer tb = B (single M tile): W1 is then streamed
    exactly once per head instead of once per batch tile."""
    tb_cands = []
    for c in (b_pad, 1024, 512, 256, 128, 64, 32, 16, 8):
        if c <= b_pad and b_pad % c == 0 and c not in tb_cands:
            tb_cands.append(c)
    tk_cands = [c for c in (512, 256, 128) if c <= f_pad and f_pad % c == 0]
    if not tk_cands:
        tk_cands = [f_pad]
    for tb in tb_cands:
        for tk in tk_cands:
            if _vmem_working_set(tb, tk, f_pad, c_pad) <= budget_bytes:
                return tb, tk
    return tb_cands[-1], tk_cands[-1]


def _vmem_caps():
    """(tile working-set budget, vmem_limit_bytes) for the current device."""
    try:
        cap = int(pltpu.get_tpu_info().vmem_capacity_bytes)
    except Exception:  # interpret mode / older runtimes: assume v7x (64 MiB)
        cap = 64 * 1024 * 1024
    budget = max(int(cap * 0.70), 12 << 20)
    limit = max(min(cap - (8 << 20), int(cap * 0.90)), 16 << 20)
    return budget, limit


def _multihead_kernel(x_ref, w1_ref, b1_ref, w2_ref, b2_ref, o_ref, acc_ref):
    k = pl.program_id(2)

    @pl.when(k == 0)
    def _init():
        acc_ref[...] = jnp.zeros_like(acc_ref)

    # Partial first matmul: x[:, k-tile] @ W1[k-tile, :]  (bf16 in, f32 acc).
    acc_ref[...] += jnp.dot(x_ref[...], w1_ref[...],
                            preferred_element_type=jnp.float32)

    @pl.when(k == pl.num_programs(2) - 1)
    def _finalize():
        # f32 epilogue: bias + ReLU.  Dropout(p=0.0) is identity.
        h = jnp.maximum(acc_ref[...] + b1_ref[...], 0.0)
        # Second matmul over the (padded, lane-dense) class axis.
        o = jnp.dot(h.astype(w2_ref.dtype), w2_ref[...],
                    preferred_element_type=jnp.float32)
        o_ref[...] = (o + b2_ref[...]).astype(o_ref.dtype)


@jax.jit
def _run_multihead(x, w1, b1, w2, b2):
    b_pad, f_pad = x.shape
    H = w1.shape[0]
    c_pad = w2.shape[2]

    budget, vmem_limit = _vmem_caps()
    tb, tk = _choose_tiles(b_pad, f_pad, c_pad, budget)
    m_tiles = b_pad // tb
    k_tiles = f_pad // tk
    # NOTE(v7x megacore): with H heads and m_tiles M tiles the 2 TensorCores
    # split H*m_tiles parallel tiles; when that product is odd the split is
    # uneven, but forcing m_tiles even would re-stream W1 (a bigger loss in
    # the weight-bandwidth-bound regime), so we keep the single-M-tile layout.
    grid = (H, m_tiles, k_tiles)

    isz = lambda a: jnp.dtype(a.dtype).itemsize
    flops = 2 * H * b_pad * f_pad * (f_pad + c_pad)
    bytes_accessed = (H * b_pad * f_pad * isz(x)                # x per head
                      + H * m_tiles * f_pad * f_pad * isz(w1)   # W1 per M tile
                      + H * f_pad * isz(b1)
                      + H * f_pad * c_pad * isz(w2)
                      + H * c_pad * isz(b2)
                      + H * b_pad * c_pad * 4)                  # output slab

    return pl.pallas_call(
        _multihead_kernel,
        out_shape=jax.ShapeDtypeStruct((H, b_pad, c_pad), jnp.float32),
        grid_spec=pltpu.PrefetchScalarGridSpec(
            num_scalar_prefetch=0,
            grid=grid,
            in_specs=[
                pl.BlockSpec((tb, tk), lambda h, m, k: (m, k)),                       # x
                pl.BlockSpec((pl.Squeezed(), tk, f_pad), lambda h, m, k: (h, k, 0)),  # W1
                pl.BlockSpec((pl.Squeezed(), 1, f_pad), lambda h, m, k: (h, 0, 0)),   # b1
                pl.BlockSpec((pl.Squeezed(), f_pad, c_pad), lambda h, m, k: (h, 0, 0)),  # W2
                pl.BlockSpec((pl.Squeezed(), 1, c_pad), lambda h, m, k: (h, 0, 0)),   # b2
            ],
            out_specs=pl.BlockSpec((pl.Squeezed(), tb, c_pad),
                                   lambda h, m, k: (h, m, 0)),
            scratch_shapes=[pltpu.VMEM((tb, f_pad), jnp.float32)],
        ),
        compiler_params=pltpu.CompilerParams(
            dimension_semantics=("parallel", "parallel", "arbitrary"),
            vmem_limit_bytes=int(vmem_limit)),
        cost_estimate=pl.CostEstimate(flops=flops, transcendentals=0,
                                      bytes_accessed=bytes_accessed),
    )(x, w1, b1, w2, b2)


class MultiHeadPallas:
    """JAX/Pallas equivalent of kvt MultiHead (eval-mode dropout = identity)."""

    def __init__(self, in_features, num_classes_list, head_names,
                 dropout_rate=0.0, *, key=None, param_dtype=jnp.bfloat16):
        assert len(head_names) == len(num_classes_list)
        self.in_features = in_features
        self.num_classes_list = list(num_classes_list)
        self.head_names = list(head_names)
        self.dropout_rate = dropout_rate
        self.param_dtype = param_dtype

        if key is None:
            key = jax.random.PRNGKey(0)

        F = in_features
        self.f_pad = _round_up(F, 128)                          # lane-aligned K
        self.c_pad = _round_up(max(self.num_classes_list), 128)  # lane-dense out
        bound = 1.0 / math.sqrt(F)   # nn.Linear kaiming-uniform-like bound

        w1s, b1s, w2s, b2s = [], [], [], []
        for i, c in enumerate(self.num_classes_list):
            k1, k2, k3, k4 = jax.random.split(jax.random.fold_in(key, i), 4)
            # Stored already transposed: (F_in, F_out) so kernel computes x @ W.
            w1 = jax.random.uniform(k1, (F, F), minval=-bound, maxval=bound,
                                    dtype=jnp.float32)
            b1 = jax.random.uniform(k2, (1, F), minval=-bound, maxval=bound,
                                    dtype=jnp.float32)
            w2 = jax.random.uniform(k3, (F, c), minval=-bound, maxval=bound,
                                    dtype=jnp.float32)
            b2 = jax.random.uniform(k4, (1, c), minval=-bound, maxval=bound,
                                    dtype=jnp.float32)
            dF = self.f_pad - F
            w1s.append(jnp.pad(w1, ((0, dF), (0, dF))))
            b1s.append(jnp.pad(b1, ((0, 0), (0, dF))))
            w2s.append(jnp.pad(w2, ((0, dF), (0, self.c_pad - c))))
            b2s.append(jnp.pad(b2, ((0, 0), (0, self.c_pad - c))))

        # bf16 weights (halved HBM traffic, MXU-native); f32 biases so the
        # bias+ReLU epilogue stays on the f32 VPU path (v5e has no bf16 VPU).
        self.w1 = jnp.stack(w1s).astype(param_dtype)   # (H, Fp, Fp)
        self.b1 = jnp.stack(b1s)                       # (H, 1, Fp)    f32
        self.w2 = jnp.stack(w2s).astype(param_dtype)   # (H, Fp, Cpad)
        self.b2 = jnp.stack(b2s)                       # (H, 1, Cpad)  f32

    def __call__(self, x):
        B, F = x.shape
        assert F == self.in_features
        b_pad = _round_up(B, 8)
        x_c = x.astype(self.param_dtype)
        if (b_pad != B) or (self.f_pad != F):
            x_c = jnp.pad(x_c, ((0, b_pad - B), (0, self.f_pad - F)))
        slab = _run_multihead(x_c, self.w1, self.b1, self.w2, self.b2)
        return {name: slab[i, :B, :c]
                for i, (name, c) in enumerate(zip(self.head_names,
                                                  self.num_classes_list))}


def _reference(x_c, model):
    """Pure-JAX reference on the same (bf16-rounded, unpadded) parameters."""
    F = model.in_features
    out = {}
    for i, (name, c) in enumerate(zip(model.head_names,
                                      model.num_classes_list)):
        w1 = model.w1[i, :F, :F]
        b1 = model.b1[i, :, :F]
        w2 = model.w2[i, :F, :c]
        b2 = model.b2[i, :, :c]
        h = jnp.dot(x_c, w1, preferred_element_type=jnp.float32) + b1
        h = jnp.maximum(h, 0.0).astype(model.param_dtype)
        o = jnp.dot(h, w2, preferred_element_type=jnp.float32) + b2
        out[name] = o
    return out


if __name__ == "__main__":
    key = jax.random.PRNGKey(0)
    B, F = 8, 32
    num_classes_list = [4, 6, 10]
    head_names = ["grapheme", "vowel", "consonant"]

    x = jax.random.normal(jax.random.fold_in(key, 100), (B, F),
                          dtype=jnp.float32)

    model = MultiHeadPallas(F, num_classes_list, head_names,
                            dropout_rate=0.0, key=key)

    out = model(x)
    out = jax.tree_util.tree_map(jax.block_until_ready, out)

    ref = _reference(x.astype(model.param_dtype), model)
    for name, c in zip(head_names, num_classes_list):
        assert out[name].shape == (B, c), (name, out[name].shape)
        assert jnp.allclose(out[name], ref[name], atol=1e-4, rtol=1e-4), name

    print("KERNEL_OK")
</pallas_src>

<mosaic_0001>
module attributes {stable_mosaic.version = 11 : i64} {
  func.func @_multihead_kernel(%arg0: i32, %arg1: i32, %arg2: i32, %arg3: memref<8x128xbf16, #tpu.memory_space<vmem>>, %arg4: memref<1x128x128xbf16, #tpu.memory_space<vmem>>, %arg5: memref<1x1x128xf32, #tpu.memory_space<vmem>>, %arg6: memref<1x128x128xbf16, #tpu.memory_space<vmem>>, %arg7: memref<1x1x128xf32, #tpu.memory_space<vmem>>, %arg8: memref<1x8x128xf32, #tpu.memory_space<vmem>>, %arg9: memref<8x128xf32, #tpu.memory_space<vmem>>) attributes {dimension_semantics = [#tpu.dimension_semantics<parallel>, #tpu.dimension_semantics<parallel>, #tpu.dimension_semantics<arbitrary>], iteration_bounds = array<i64: 3, 1, 1>, scalar_prefetch = 0 : i64, scratch_operands = 1 : i64, tpu.core_type = #tpu.core_type<tc>, window_params = [{transform_indices = @transform_0, window_bounds = array<i64: 8, 128>}, {transform_indices = @transform_1, window_bounds = array<i64: 1, 128, 128>}, {transform_indices = @transform_2, window_bounds = array<i64: 1, 1, 128>}, {transform_indices = @transform_3, window_bounds = array<i64: 1, 128, 128>}, {transform_indices = @transform_4, window_bounds = array<i64: 1, 1, 128>}, {transform_indices = @transform_5, window_bounds = array<i64: 1, 8, 128>}]} {
    %c0_i32 = arith.constant 0 : i32
    %0 = arith.cmpi eq, %arg2, %c0_i32 : i32
    %1 = arith.extui %0 : i1 to i32
    %c0_i32_0 = arith.constant 0 : i32
    %2 = arith.cmpi ne, %1, %c0_i32_0 : i32
    scf.if %2 {
      %cst_11 = arith.constant 0.000000e+00 : f32
      %13 = vector.broadcast %cst_11 : f32 to vector<8x128xf32>
      %c0_12 = arith.constant 0 : index
      %c0_13 = arith.constant 0 : index
      %14 = vector.load %arg9[%c0_12, %c0_13] : memref<8x128xf32, #tpu.memory_space<vmem>>, vector<8x128xf32>
      tpu.vector_store %arg9[%c0_12, %c0_13], %13 {strides = array<i32>} : memref<8x128xf32, #tpu.memory_space<vmem>>, vector<8x128xf32>,
    } else {
    }
    %c0 = arith.constant 0 : index
    %c0_1 = arith.constant 0 : index
    %3 = vector.load %arg9[%c0, %c0_1] : memref<8x128xf32, #tpu.memory_space<vmem>>, vector<8x128xf32>
    %c0_2 = arith.constant 0 : index
    %c0_3 = arith.constant 0 : index
    %4 = vector.load %arg3[%c0_2, %c0_3] : memref<8x128xbf16, #tpu.memory_space<vmem>>, vector<8x128xbf16>
    %c0_4 = arith.constant 0 : index
    %c0_5 = arith.constant 0 : index
    %c0_6 = arith.constant 0 : index
    %5 = vector.load %arg4[%c0_4, %c0_5, %c0_6] : memref<1x128x128xbf16, #tpu.memory_space<vmem>>, vector<1x128x128xbf16>
    %6 = vector.shape_cast %5 : vector<1x128x128xbf16> to vector<128x128xbf16>
    %cst = arith.constant dense<0.000000e+00> : vector<8x128xf32>
    %7 = tpu.matmul %4, %6, %cst {dimension_numbers = #tpu.dot_dimension_numbers<[1], [0], [0], [1], [0, 0, 1, 1], [], []>} : vector<8x128xbf16>, vector<128x128xbf16>, vector<8x128xf32> -> vector<8x128xf32>
    %8 = arith.addf %3, %7 : vector<8x128xf32>
    %c0_7 = arith.constant 0 : index
    %c0_8 = arith.constant 0 : index
    %9 = vector.load %arg9[%c0_7, %c0_8] : memref<8x128xf32, #tpu.memory_space<vmem>>, vector<8x128xf32>
    tpu.vector_store %arg9[%c0_7, %c0_8], %8 {strides = array<i32>} : memref<8x128xf32, #tpu.memory_space<vmem>>, vector<8x128xf32>,
    %c0_i32_9 = arith.constant 0 : i32
    %10 = arith.cmpi eq, %arg2, %c0_i32_9 : i32
    %11 = arith.extui %10 : i1 to i32
    %c0_i32_10 = arith.constant 0 : i32
    %12 = arith.cmpi ne, %11, %c0_i32_10 : i32
    scf.if %12 {
      %c0_11 = arith.constant 0 : index
      %c0_12 = arith.constant 0 : index
      %13 = vector.load %arg9[%c0_11, %c0_12] : memref<8x128xf32, #tpu.memory_space<vmem>>, vector<8x128xf32>
      %c0_13 = arith.constant 0 : index
      %c0_14 = arith.constant 0 : index
      %c0_15 = arith.constant 0 : index
      %14 = vector.load %arg5[%c0_13, %c0_14, %c0_15] : memref<1x1x128xf32, #tpu.memory_space<vmem>>, vector<1x1x128xf32>
      %15 = vector.shape_cast %14 : vector<1x1x128xf32> to vector<1x128xf32>
      %16 = vector.broadcast %15 : vector<1x128xf32> to vector<8x128xf32>
      %17 = arith.addf %13, %16 : vector<8x128xf32>
      %cst_16 = arith.constant 0.000000e+00 : f32
      %18 = vector.broadcast %cst_16 : f32 to vector<8x128xf32>
      %19 = arith.maximumf %17, %18 : vector<8x128xf32>
      %20 = arith.truncf %19 : vector<8x128xf32> to vector<8x128xbf16>
      %c0_17 = arith.constant 0 : index
      %c0_18 = arith.constant 0 : index
      %c0_19 = arith.constant 0 : index
      %21 = vector.load %arg6[%c0_17, %c0_18, %c0_19] : memref<1x128x128xbf16, #tpu.memory_space<vmem>>, vector<1x128x128xbf16>
      %22 = vector.shape_cast %21 : vector<1x128x128xbf16> to vector<128x128xbf16>
      %cst_20 = arith.constant dense<0.000000e+00> : vector<8x128xf32>
      %23 = tpu.matmul %20, %22, %cst_20 {dimension_numbers = #tpu.dot_dimension_numbers<[1], [0], [0], [1], [0, 0, 1, 1], [], []>} : vector<8x128xbf16>, vector<128x128xbf16>, vector<8x128xf32> -> vector<8x128xf32>
      %c0_21 = arith.constant 0 : index
      %c0_22 = arith.constant 0 : index
      %c0_23 = arith.constant 0 : index
      %24 = vector.load %arg7[%c0_21, %c0_22, %c0_23] : memref<1x1x128xf32, #tpu.memory_space<vmem>>, vector<1x1x128xf32>
      %25 = vector.shape_cast %24 : vector<1x1x128xf32> to vector<1x128xf32>
      %26 = vector.broadcast %25 : vector<1x128xf32> to vector<8x128xf32>
      %27 = arith.addf %23, %26 : vector<8x128xf32>
      %c0_24 = arith.constant 0 : index
      %c0_25 = arith.constant 0 : index
      %c0_26 = arith.constant 0 : index
      %28 = vector.load %arg8[%c0_24, %c0_25, %c0_26] : memref<1x8x128xf32, #tpu.memory_space<vmem>>, vector<1x8x128xf32>
      %29 = vector.shape_cast %28 : vector<1x8x128xf32> to vector<8x128xf32>
      %30 = vector.shape_cast %27 : vector<8x128xf32> to vector<1x8x128xf32>
      tpu.vector_store %arg8[%c0_24, %c0_25, %c0_26], %30 {strides = array<i32>} : memref<1x8x128xf32, #tpu.memory_space<vmem>>, vector<1x8x128xf32>,
    } else {
    }
    return
  }
  func.func @transform_0(%arg0: i32, %arg1: i32, %arg2: i32) -> (i32, i32) {
    %c0_i32 = arith.constant 0 : i32
    return %arg1, %arg2 : i32, i32
  }
  func.func @transform_1(%arg0: i32, %arg1: i32, %arg2: i32) -> (i32, i32, i32) {
    %c0_i32 = arith.constant 0 : i32
    %c0_i32_0 = arith.constant 0 : i32
    return %arg0, %arg2, %c0_i32 : i32, i32, i32
  }
  func.func @transform_2(%arg0: i32, %arg1: i32, %arg2: i32) -> (i32, i32, i32) {
    %c0_i32 = arith.constant 0 : i32
    %c0_i32_0 = arith.constant 0 : i32
    %c0_i32_1 = arith.constant 0 : i32
    return %arg0, %c0_i32, %c0_i32_0 : i32, i32, i32
  }
  func.func @transform_3(%arg0: i32, %arg1: i32, %arg2: i32) -> (i32, i32, i32) {
    %c0_i32 = arith.constant 0 : i32
    %c0_i32_0 = arith.constant 0 : i32
    %c0_i32_1 = arith.constant 0 : i32
    return %arg0, %c0_i32, %c0_i32_0 : i32, i32, i32
  }
  func.func @transform_4(%arg0: i32, %arg1: i32, %arg2: i32) -> (i32, i32, i32) {
    %c0_i32 = arith.constant 0 : i32
    %c0_i32_0 = arith.constant 0 : i32
    %c0_i32_1 = arith.constant 0 : i32
    return %arg0, %c0_i32, %c0_i32_0 : i32, i32, i32
  }
  func.func @transform_5(%arg0: i32, %arg1: i32, %arg2: i32) -> (i32, i32, i32) {
    %c0_i32 = arith.constant 0 : i32
    %c0_i32_0 = arith.constant 0 : i32
    return %arg0, %arg1, %c0_i32 : i32, i32, i32
  }
}

</mosaic_0001>

<llo_original>
// kernel: _run_multihead.1
$region0: #{_run_multihead.1}
  #allocation0 [shape = 'u32[]', space=smem, size = 0x4, offset = 0x4, fixed_abs, tag = 'smem constant byte address 0x4 - core index']
  #allocation1 [shape = 'u32[144,128]{1,0:T(1,128)}', space=vmem, size = 0x12000, scoped, tag = 'internal scratch']
  #allocation2 [shape = 'f32[8,128]{1,0:T(8,128)}', space=vmem, size = 0x1000, scoped, tag = 'scratch operand']
  %s0 = inlined_call_operand.hbm [shape: bf16[8,128], index: 0, kind: input, shape index: {}]
  %s1 = inlined_call_operand.hbm [shape: bf16[3,128,128], index: 1, kind: input, shape index: {}]
  %s2 = inlined_call_operand.vmem [shape: f32[3,1,128], index: 2, kind: input, shape index: {}]
  %s3 = inlined_call_operand.hbm [shape: bf16[3,128,128], index: 3, kind: input, shape index: {}]
  %s4 = inlined_call_operand.vmem [shape: f32[3,1,128], index: 4, kind: input, shape index: {}]
  %s5 = inlined_call_operand.hbm [shape: f32[3,8,128], index: 5, kind: output, shape index: {}]
  %s6 = sld [smem:[#allocation0]]
  $region73: #{_run_multihead.1} parent=0
    _
  %s8 = ssub.s32 1, %s6
  %s9 = scalar_select 0, %s8, %s6
  $region1: #{_run_multihead.1} parent=0
    #allocation3 [shape = 'u8[2048]{0}', space=vmem, size = 0x800, scoped, tag = 'input window, operand 0, single buffered']
    #allocation4 [shape = 's32[2]{0}', space=sflag, size = 0x8, scoped, tag = 'scoped memory for _run_multihead.1']
    #allocation5 [shape = 's32[2]{0}', space=sflag, size = 0x8, scoped, tag = 'scoped memory for _run_multihead.1']
    #allocation6 [shape = 'u8[65536]{0}', space=vmem, size = 0x10000, scoped, tag = 'input window, operand 1']
    #allocation7 [shape = 's32[2]{0}', space=sflag, size = 0x8, scoped, tag = 'scoped memory for _run_multihead.1']
    #allocation8 [shape = 'u8[65536]{0}', space=vmem, size = 0x10000, scoped, tag = 'input window, operand 3']
    #allocation9 [shape = 'u8[8192]{0}', space=vmem, size = 0x2000, scoped, tag = 'output window, operand 0']
    %10 = vsyncpa [#allocation4], 0
    %11 = vsyncpa [#allocation7], 0
    %s12 = scalar_lea.sflag [#allocation7], 1
    %13 = vsyncpa %s12, 0
    %14 = vsyncpa [#allocation5], 0
    %s15 = scalar_lea.sflag [#allocation5], 1
    %16 = vsyncpa %s15, 0
    loop: start=0, step=1, limit=5
    $region2: #{_run_multihead.1} parent=1 // loop_pre_header
      _
    $region3: #{_run_multihead.1} parent=1 // loop_header
      %s18 = sphi 0, %s22
      %p19 = scmp.ge.s32.totalorder %s18, 5
      %s25 = sphi 0, %s44
      %s26 = sphi 0, %s40
      %s27 = sphi 0, %s36
      %s28 = sphi 0, %s25
      %s29 = sphi 0, %s26
      %s30 = sphi 0, %s27
      %s31 = sphi 0, %s28
      %s32 = sphi 0, %s29
      %s33 = sphi 0, %s30
      %s49 = sphi 0, %s51
      %s52 = sphi 0, %s49
      %s53 = sphi 0, %s52
      %s69 = sphi 0, %s53
      %s77 = sphi 0, %s79
      %s80 = sphi 0, %s77
      %s81 = sphi 0, %s80
      %s97 = sphi 0, %s81
      %s103 = sphi 0, %s105
      %s106 = sphi 0, %s103
      %s107 = sphi 0, %s106
      %s123 = sphi 0, %s107
      %s129 = sphi 0, %s131
      %s132 = sphi 0, %s129
      %s133 = sphi 0, %s132
      %s149 = sphi 0, %s133
      %s155 = sphi 0, %s157
      %s158 = sphi 0, %s155
      %s159 = sphi 0, %s158
      %s175 = sphi 0, %s159
      %s183 = sphi 0, %s185
      %s186 = sphi 0, %s183
      %s187 = sphi 0, %s186
      %s203 = sphi 0, %s187
    $region4: #{_run_multihead.1} parent=1 // loop_header_branch
      %21 = sbr.rel (%p19) target = $region8
    $region5: #{_run_multihead.1} parent=1 // loop_body
      %s23 = ssub.s32 %s18, 1
      %s24 = ssub.s32 %s18, 2
      %s34 = sadd.s32 1, %s27
      %p35 = scmp.ge.s32.totalorder %s34, 1
      %s36 = scalar_select %p35, 0, %s34
      %s37 = sadd.s32 1, %s26
      %s38 = scalar_select %p35, %s37, %s26
      %p39 = scmp.ge.s32.totalorder %s38, 1
      %s40 = scalar_select %p39, 0, %s38
      %s41 = sadd.s32 1, %s25
      %s42 = scalar_select %p39, %s41, %s25
      %p43 = scmp.ge.s32.totalorder %s42, 3
      %s44 = scalar_select %p43, 0, %s42
      %s45 = ssub.s32 %s26, %s40
      %s46 = ssub.s32 %s27, %s36
      %s47 = sor.u32 %s45, %s46
      %p48 = scmp.eq.s32.totalorder %s47, 0
      %s50 = sadd.s32 %s49, 1
      %s51 = scalar_select %p48, %s49, %s50
      %p54 = pneg %p48
      %p55 = scmp.eq.s32.totalorder %s18, 2
      %p56 = por %p54, %p55
      %p57 = scmp.ne.s32.totalorder %s49, %s52
      %p58 = scmp.eq.s32.totalorder %s18, 0
      %p59 = por %p57, %p58
      %p60 = scmp.ne.s32.totalorder %s49, %s52
      %p61 = scmp.eq.s32.totalorder %s23, 2
      %p62 = por %p60, %p61
      %p63 = scmp.ne.s32.totalorder %s52, %s53
      %p64 = scmp.eq.s32.totalorder %s23, 0
      %p65 = por %p63, %p64
      %p66 = scmp.ne.s32.totalorder %s52, %s53
      %p67 = scmp.eq.s32.totalorder %s24, 2
      %p68 = por %p66, %p67
      %p70 = scmp.ne.s32.totalorder %s53, %s69
      %p71 = scmp.eq.s32.totalorder %s24, 0
      %p72 = por %p70, %p71
      %s73 = ssub.s32 %s25, %s44
      %s74 = ssub.s32 %s27, %s36
      %s75 = sor.u32 %s73, %s74
      %p76 = scmp.eq.s32.totalorder %s75, 0
      %s78 = sadd.s32 %s77, 1
      %s79 = scalar_select %p76, %s77, %s78
      %p82 = pneg %p76
      %p83 = scmp.eq.s32.totalorder %s18, 2
      %p84 = por %p82, %p83
      %p85 = scmp.ne.s32.totalorder %s77, %s80
      %p86 = scmp.eq.s32.totalorder %s18, 0
      %p87 = por %p85, %p86
      %p88 = scmp.ne.s32.totalorder %s77, %s80
      %p89 = scmp.eq.s32.totalorder %s23, 2
      %p90 = por %p88, %p89
      %p91 = scmp.ne.s32.totalorder %s80, %s81
      %p92 = scmp.eq.s32.totalorder %s23, 0
      %p93 = por %p91, %p92
      %p94 = scmp.ne.s32.totalorder %s80, %s81
      %p95 = scmp.eq.s32.totalorder %s24, 2
      %p96 = por %p94, %p95
      %p98 = scmp.ne.s32.totalorder %s81, %s97
      %p99 = scmp.eq.s32.totalorder %s24, 0
      %p100 = por %p98, %p99
      %s101 = ssub.s32 %s25, %s44
      %p102 = scmp.eq.s32.totalorder %s101, 0
      %s104 = sadd.s32 %s103, 1
      %s105 = scalar_select %p102, %s103, %s104
      %p108 = pneg %p102
      %p109 = scmp.eq.s32.totalorder %s18, 2
      %p110 = por %p108, %p109
      %p111 = scmp.ne.s32.totalorder %s103, %s106
      %p112 = scmp.eq.s32.totalorder %s18, 0
      %p113 = por %p111, %p112
      %p114 = scmp.ne.s32.totalorder %s103, %s106
      %p115 = scmp.eq.s32.totalorder %s23, 2
      %p116 = por %p114, %p115
      %p117 = scmp.ne.s32.totalorder %s106, %s107
      %p118 = scmp.eq.s32.totalorder %s23, 0
      %p119 = por %p117, %p118
      %p120 = scmp.ne.s32.totalorder %s106, %s107
      %p121 = scmp.eq.s32.totalorder %s24, 2
      %p122 = por %p120, %p121
      %p124 = scmp.ne.s32.totalorder %s107, %s123
      %p125 = scmp.eq.s32.totalorder %s24, 0
      %p126 = por %p124, %p125
      %s127 = ssub.s32 %s25, %s44
      %p128 = scmp.eq.s32.totalorder %s127, 0
      %s130 = sadd.s32 %s129, 1
      %s131 = scalar_select %p128, %s129, %s130
      %p134 = pneg %p128
      %p135 = scmp.eq.s32.totalorder %s18, 2
      %p136 = por %p134, %p135
      %p137 = scmp.ne.s32.totalorder %s129, %s132
      %p138 = scmp.eq.s32.totalorder %s18, 0
      %p139 = por %p137, %p138
      %p140 = scmp.ne.s32.totalorder %s129, %s132
      %p141 = scmp.eq.s32.totalorder %s23, 2
      %p142 = por %p140, %p141
      %p143 = scmp.ne.s32.totalorder %s132, %s133
      %p144 = scmp.eq.s32.totalorder %s23, 0
      %p145 = por %p143, %p144
      %p146 = scmp.ne.s32.totalorder %s132, %s133
      %p147 = scmp.eq.s32.totalorder %s24, 2
      %p148 = por %p146, %p147
      %p150 = scmp.ne.s32.totalorder %s133, %s149
      %p151 = scmp.eq.s32.totalorder %s24, 0
      %p152 = por %p150, %p151
      %s153 = ssub.s32 %s25, %s44
      %p154 = scmp.eq.s32.totalorder %s153, 0
      %s156 = sadd.s32 %s155, 1
      %s157 = scalar_select %p154, %s155, %s156
      %p160 = pneg %p154
      %p161 = scmp.eq.s32.totalorder %s18, 2
      %p162 = por %p160, %p161
      %p163 = scmp.ne.s32.totalorder %s155, %s158
      %p164 = scmp.eq.s32.totalorder %s18, 0
      %p165 = por %p163, %p164
      %p166 = scmp.ne.s32.totalorder %s155, %s158
      %p167 = scmp.eq.s32.totalorder %s23, 2
      %p168 = por %p166, %p167
      %p169 = scmp.ne.s32.totalorder %s158, %s159
      %p170 = scmp.eq.s32.totalorder %s23, 0
      %p171 = por %p169, %p170
      %p172 = scmp.ne.s32.totalorder %s158, %s159
      %p173 = scmp.eq.s32.totalorder %s24, 2
      %p174 = por %p172, %p173
      %p176 = scmp.ne.s32.totalorder %s159, %s175
      %p177 = scmp.eq.s32.totalorder %s24, 0
      %p178 = por %p176, %p177
      %s179 = ssub.s32 %s25, %s44
      %s180 = ssub.s32 %s26, %s40
      %s181 = sor.u32 %s179, %s180
      %p182 = scmp.eq.s32.totalorder %s181, 0
      %s184 = sadd.s32 %s183, 1
      %s185 = scalar_select %p182, %s183, %s184
      %p188 = pneg %p182
      %p189 = scmp.eq.s32.totalorder %s18, 2
      %p190 = por %p188, %p189
      %p191 = scmp.ne.s32.totalorder %s183, %s186
      %p192 = scmp.eq.s32.totalorder %s18, 0
      %p193 = por %p191, %p192
      %p194 = scmp.ne.s32.totalorder %s183, %s186
      %p195 = scmp.eq.s32.totalorder %s23, 2
      %p196 = por %p194, %p195
      %p197 = scmp.ne.s32.totalorder %s186, %s187
      %p198 = scmp.eq.s32.totalorder %s23, 0
      %p199 = por %p197, %p198
      %p200 = scmp.ne.s32.totalorder %s186, %s187
      %p201 = scmp.eq.s32.totalorder %s24, 2
      %p202 = por %p200, %p201
      %p204 = scmp.ne.s32.totalorder %s187, %s203
      %p205 = scmp.eq.s32.totalorder %s24, 0
      %p206 = por %p204, %p205
      %p207 = scmp.le.s32.totalorder 1, %s18
      %p208 = scmp.lt.s32.totalorder %s18, 4
      %p209 = pnand %p207, %p208
      %p210 = pneg %p209
      // Predicated region
      $region9: #{_run_multihead.1} parent=5 // pred_check
        _
      $region10: #{_run_multihead.1} parent=5 // pred_check_branch
        %212 = sbr.rel (%p209) target = $region12
      $region11: #{_run_multihead.1} parent=5 // pred_region
        %s213 = ssub.s32 %s18, 1
        // Predicated region
        $region13: #{_run_multihead.1} parent=11 // pred_check
          %p214 = pneg %p65
        $region14: #{_run_multihead.1} parent=11 // pred_check_branch
          %216 = sbr.rel (%p214) target = $region16
        $region15: #{_run_multihead.1} parent=11 // pred_region
          %s218 = ssub.s32 64, 64
          %219 = vsyncadd [#allocation4], %s218
          %s220 = sadd.s32 %s30, %s29
          %s221 = smul.addr %s220, 64
          %s222 = scalar_lea.hbm %s0, %s221
          %s224 = sshll.u32 [#allocation3], 4
          %s225 = int_to_ptr.vmem [resolvable:$true] %s224
          %227 = dma.hbm_to_vmem [thread:$0]  %s222, 64, %s225, [#allocation4]
        $region16: #{_run_multihead.1} parent=11 // pred_fallthru
          _
      $region12: #{_run_multihead.1} parent=5 // pred_fallthru
        _
      %p228 = scmp.lt.s32.totalorder %s18, 3
      // Predicated region
      $region17: #{_run_multihead.1} parent=5 // pred_check
        %p229 = pneg %p228
      $region18: #{_run_multihead.1} parent=5 // pred_check_branch
        %231 = sbr.rel (%p229) target = $region20
      $region19: #{_run_multihead.1} parent=5 // pred_region
        // Predicated region
        $region21: #{_run_multihead.1} parent=19 // pred_check
          %p232 = pneg %p87
        $region22: #{_run_multihead.1} parent=19 // pred_check_branch
          %234 = sbr.rel (%p232) target = $region24
        $region23: #{_run_multihead.1} parent=19 // pred_region
          %s235 = sand.u32 %s18, 1
          %s236 = scalar_lea.sflag [#allocation7], %s235
          %s237 = sand.u32 %s77, 1
          %s238 = smul.addr %s237, 64
          %s239 = scalar_lea.vmem [#allocation6], %s238
          %s240 = smul.u32 16, %s27
          %s242 = ssub.s32 1024, 1024
          %243 = vsyncadd %s236, %s242
          %s244 = smul.addr %s25, 16
          %s245 = sadd.s32 %s240, %s244
          %s246 = smul.addr %s245, 64
          %s247 = scalar_lea.hbm %s1, %s246
          %s248 = sshll.u32 %s239, 4
          %s249 = int_to_ptr.vmem [resolvable:$true] %s248
          %254 = dma.hbm_to_vmem [thread:$0]  %s247, 1024, %s249, %s236, 64, 64, 4
        $region24: #{_run_multihead.1} parent=19 // pred_fallthru
          _
        // Predicated region
        $region25: #{_run_multihead.1} parent=19 // pred_check
          %p255 = pneg %p113
        $region26: #{_run_multihead.1} parent=19 // pred_check_branch
          %257 = sbr.rel (%p255) target = $region28
        $region27: #{_run_multihead.1} parent=19 // pred_region
          %p258 = scmp.lt.s32.totalorder %s25, 2
          %s259 = scalar_select %p258, %s25, 2
          %s260 = scalar_lea.vmem %s2, %s259
        $region28: #{_run_multihead.1} parent=19 // pred_fallthru
          _
        // Predicated region
        $region29: #{_run_multihead.1} parent=19 // pred_check
          %p261 = pneg %p139
        $region30: #{_run_multihead.1} parent=19 // pred_check_branch
          %263 = sbr.rel (%p261) target = $region32
        $region31: #{_run_multihead.1} parent=19 // pred_region
          %s264 = sand.u32 %s18, 1
          %s265 = scalar_lea.sflag [#allocation7], %s264
          %s266 = sand.u32 %s129, 1
          %s267 = smul.addr %s266, 64
          %s268 = scalar_lea.vmem [#allocation8], %s267
          %s270 = ssub.s32 1024, 1024
          %271 = vsyncadd %s265, %s270
          %s272 = smul.addr %s25, 16
          %s273 = smul.addr %s272, 64
          %s274 = scalar_lea.hbm %s3, %s273
          %s275 = sshll.u32 %s268, 4
          %s276 = int_to_ptr.vmem [resolvable:$true] %s275
          %281 = dma.hbm_to_vmem [thread:$0]  %s274, 1024, %s276, %s265, 64, 64, 4
        $region32: #{_run_multihead.1} parent=19 // pred_fallthru
          _
        // Predicated region
        $region33: #{_run_multihead.1} parent=19 // pred_check
          %p282 = pneg %p165
        $region34: #{_run_multihead.1} parent=19 // pred_check_branch
          %284 = sbr.rel (%p282) target = $region36
        $region35: #{_run_multihead.1} parent=19 // pred_region
          %p285 = scmp.lt.s32.totalorder %s25, 2
          %s286 = scalar_select %p285, %s25, 2
          %s287 = scalar_lea.vmem %s4, %s286
        $region36: #{_run_multihead.1} parent=19 // pred_fallthru
          _
      $region20: #{_run_multihead.1} parent=5 // pred_fallthru
        _
      %p288 = scmp.le.s32.totalorder 1, %s18
      %p289 = scmp.lt.s32.totalorder %s18, 4
      %p290 = pnand %p288, %p289
      %p291 = pneg %p290
      // Predicated region
      $region37: #{_run_multihead.1} parent=5 // pred_check
        _
      $region38: #{_run_multihead.1} parent=5 // pred_check_branch
        %293 = sbr.rel (%p290) target = $region40
      $region39: #{_run_multihead.1} parent=5 // pred_region
        %s294 = ssub.s32 %s18, 1
        // Predicated region
        $region41: #{_run_multihead.1} parent=39 // pred_check
          %p295 = pneg %p65
        $region42: #{_run_multihead.1} parent=39 // pred_check_branch
          %297 = sbr.rel (%p295) target = $region44
        $region43: #{_run_multihead.1} parent=39 // pred_region
          %298 = dma.done [#allocation4], 64
        $region44: #{_run_multihead.1} parent=39 // pred_fallthru
          _
        %s299 = sand.u32 %s23, 1
        %s300 = scalar_lea.sflag [#allocation7], %s299
        %s301 = sand.u32 %s80, 1
        %s302 = smul.addr %s301, 64
        %s303 = scalar_lea.vmem [#allocation6], %s302
        // Predicated region
        $region45: #{_run_multihead.1} parent=39 // pred_check
          %p304 = pneg %p93
        $region46: #{_run_multihead.1} parent=39 // pred_check_branch
          %306 = sbr.rel (%p304) target = $region48
        $region47: #{_run_multihead.1} parent=39 // pred_region
          %307 = dma.done %s300, 1024
        $region48: #{_run_multihead.1} parent=39 // pred_fallthru
          _
        %s308 = sand.u32 %s23, 1
        %s309 = scalar_lea.sflag [#allocation7], %s308
        %s310 = sand.u32 %s132, 1
        %s311 = smul.addr %s310, 64
        %s312 = scalar_lea.vmem [#allocation8], %s311
        // Predicated region
        $region49: #{_run_multihead.1} parent=39 // pred_check
          %p313 = pneg %p145
        $region50: #{_run_multihead.1} parent=39 // pred_check_branch
          %315 = sbr.rel (%p313) target = $region52
        $region51: #{_run_multihead.1} parent=39 // pred_region
          %316 = dma.done %s309, 1024
        $region52: #{_run_multihead.1} parent=39 // pred_fallthru
          _
        %p317 = pneg %p65
        %p318 = pneg %p62
        %s319 = sand.u32 %s23, 1
        %s320 = scalar_lea.sflag [#allocation7], %s319
        %s321 = sand.u32 %s80, 1
        %s322 = smul.addr %s321, 64
        %s323 = scalar_lea.vmem [#allocation6], %s322
        %p324 = pneg %p93
        %p325 = pneg %p90
        %p326 = scmp.lt.s32.totalorder %s28, 2
        %s327 = scalar_select %p326, %s28, 2
        %s328 = scalar_lea.vmem %s2, %s327
        %p329 = pneg %p119
        %p330 = pneg %p116
        %s331 = sand.u32 %s23, 1
        %s332 = scalar_lea.sflag [#allocation7], %s331
        %s333 = sand.u32 %s132, 1
        %s334 = smul.addr %s333, 64
        %s335 = scalar_lea.vmem [#allocation8], %s334
        %p336 = pneg %p145
        %p337 = pneg %p142
        %p338 = scmp.lt.s32.totalorder %s28, 2
        %s339 = scalar_select %p338, %s28, 2
        %s340 = scalar_lea.vmem %s4, %s339
        %p341 = pneg %p171
        %p342 = pneg %p168
        %p343 = pneg %p199
        %p344 = pneg %p196
        %s345 = sand.u32 %s186, 1
        %s346 = scalar_lea.sflag [#allocation5], %s345
        %s347 = sand.u32 %s186, 1
        %s348 = smul.addr %s347, 8
        %s349 = scalar_lea.vmem [#allocation9], %s348
        %s350 = smul.u32 16, %s30
        %p351 = scmp.lt.s32.totalorder %s28, 2
        %s352 = scalar_select %p351, %s28, 2
        %s353 = scalar_lea.vmem %s2, %s352
        %p354 = scmp.lt.s32.totalorder %s28, 2
        %s355 = scalar_select %p354, %s28, 2
        %s356 = scalar_lea.vmem %s4, %s355
        %p358 = scmp.eq.s32.totalorder %s30, 0
        // Predicated region
        $region53: #{_run_multihead.1} parent=39 // pred_check
          %p359 = pneg %p358
        $region54: #{_run_multihead.1} parent=39 // pred_check_branch
          %361 = sbr.rel (%p359) target = $region56
        $region55: #{_run_multihead.1} parent=39 // pred_region
          %362 = vst [vmem:[#allocation2] sm:$0xff] 0.0
        $region56: #{_run_multihead.1} parent=39 // pred_fallthru
          _
        %v363 = vld [vmem:[#allocation2] sm:$0xff]
        %v364 = vld [vmem:[#allocation3] sm:$0xf]
        %v365 = vld [vmem:[%s303] sm:$0xf]
        %v366 = vld [vmem:[%s303 + $0x4] sm:$0xf]
        %v367 = vld [vmem:[%s303 + $0x8] sm:$0xf]
        %v368 = vld [vmem:[%s303 + $0xc] sm:$0xf]
        %v369 = vld [vmem:[%s303 + $0x10] sm:$0xf]
        %v370 = vld [vmem:[%s303 + $0x14] sm:$0xf]
        %v371 = vld [vmem:[%s303 + $0x18] sm:$0xf]
        %v372 = vld [vmem:[%s303 + $0x1c] sm:$0xf]
        %v373 = vld [vmem:[%s303 + $0x20] sm:$0xf]
        %v374 = vld [vmem:[%s303 + $0x24] sm:$0xf]
        %v375 = vld [vmem:[%s303 + $0x28] sm:$0xf]
        %v376 = vld [vmem:[%s303 + $0x2c] sm:$0xf]
        %v377 = vld [vmem:[%s303 + $0x30] sm:$0xf]
        %v378 = vld [vmem:[%s303 + $0x34] sm:$0xf]
        %v379 = vld [vmem:[%s303 + $0x38] sm:$0xf]
        %v380 = vld [vmem:[%s303 + $0x3c] sm:$0xf]
        %v397 = vunpack.c.l.b16 %v365
        %v398 = vunpack.c.l.b16 %v366
        %v399 = vunpack.c.l.b16 %v367
        %v400 = vunpack.c.l.b16 %v368
        %v401 = vunpack.c.l.b16 %v369
        %v402 = vunpack.c.l.b16 %v370
        %v403 = vunpack.c.l.b16 %v371
        %v404 = vunpack.c.l.b16 %v372
        %v405 = vunpack.c.l.b16 %v373
        %v406 = vunpack.c.l.b16 %v374
        %v407 = vunpack.c.l.b16 %v375
        %v408 = vunpack.c.l.b16 %v376
        %v409 = vunpack.c.l.b16 %v377
        %v410 = vunpack.c.l.b16 %v378
        %v411 = vunpack.c.l.b16 %v379
        %v412 = vunpack.c.l.b16 %v380
        %v413 = vpack.c.b16 %v398, %v397
        %v414 = vpack.c.b16 %v400, %v399
        %v415 = vpack.c.b16 %v402, %v401
        %v416 = vpack.c.b16 %v404, %v403
        %v417 = vpack.c.b16 %v406, %v405
        %v418 = vpack.c.b16 %v408, %v407
        %v419 = vpack.c.b16 %v410, %v409
        %v420 = vpack.c.b16 %v412, %v411
        %429 = vmatprep.subr.bf16.mxu0 0
        %430 = vmatpush1.bf16.msra.mxu0 %v413
        %431 = vmatprep.subr.bf16.mxu0 0
        %432 = vmatpush1.bf16.msra.mxu0 %v414
        %433 = vmatprep.subr.bf16.mxu0 0
        %434 = vmatpush1.bf16.msra.mxu0 %v415
        %435 = vmatprep.subr.bf16.mxu0 0
        %436 = vmatpush1.bf16.msra.mxu0 %v416
        %437 = vmatprep.subr.bf16.mxu0 0
        %438 = vmatpush1.bf16.msra.mxu0 %v417
        %439 = vmatprep.subr.bf16.mxu0 0
        %440 = vmatpush1.bf16.msra.mxu0 %v418
        %441 = vmatprep.subr.bf16.mxu0 0
        %442 = vmatpush1.bf16.msra.mxu0 %v419
        %443 = vmatprep.subr.bf16.mxu0 0
        %444 = vmatpush1.bf16.msra.mxu0 %v420
        %445 = vmatprep.subr.bf16.mxu0 0
        %446 = vmatpush1.bf16.msra.mxu0 0
        %447 = vmatprep.subr.bf16.mxu0 0
        %448 = vmatpush1.bf16.msra.mxu0 0
        %449 = vmatprep.subr.bf16.mxu0 0
        %450 = vmatpush1.bf16.msra.mxu0 0
        %451 = vmatprep.subr.bf16.mxu0 0
        %452 = vmatpush1.bf16.msra.mxu0 0
        %453 = vmatprep.subr.bf16.mxu0 0
        %454 = vmatpush1.bf16.msra.mxu0 0
        %455 = vmatprep.subr.bf16.mxu0 0
        %456 = vmatpush1.bf16.msra.mxu0 0
        %457 = vmatprep.subr.bf16.mxu0 0
        %458 = vmatpush1.bf16.msra.mxu0 0
        %459 = vmatprep.subr.bf16.mxu0 0
        %460 = vmatpush1.bf16.msra.mxu0 0
        %461 = vmatprep.mubr.bf16.mxu0 0
        %462 = vmatmul.mubr.bf16.gmra.mrb[0].mxu0 %v364
        %v463 = vpop.f32.mrb[0].mxu0
        %v464 = vadd.f32 0.0, %v463
        %v465 = vpop.f32.mrb[0].mxu0
        %v466 = vpop.f32.mrb[0].mxu0
        %v467 = vpop.f32.mrb[0].mxu0
        %468 = vdwg.mxu0
        %v469 = vadd.f32 %v363, %v464
        %470 = vst [vmem:[#allocation2] sm:$0xff] %v469
        // Predicated region
        $region57: #{_run_multihead.1} parent=39 // pred_check
          %p471 = pneg %p358
        $region58: #{_run_multihead.1} parent=39 // pred_check_branch
          %473 = sbr.rel (%p471) target = $region60
        $region59: #{_run_multihead.1} parent=39 // pred_region
          %v474 = vld [vmem:[#allocation2] sm:$0xff]
          %v475 = vld [vmem:[%s353] sm:$0x1]
          %v477 = vlaneseq
          %v478 = vshrl.u32 %v477, 7
          %v479 = vsub.s32 0, %v478
          %v480 = vrot.slane %v475, %v479
          %v482 = vadd.f32 %v474, %v480
          %v483 = vmax.f32 %v482, 0.0
          %v484 = vpack.c.bf16 %v483, %v483
          %v485 = vld [vmem:[%s312] sm:$0xf]
          %v486 = vld [vmem:[%s312 + $0x4] sm:$0xf]
          %v487 = vld [vmem:[%s312 + $0x8] sm:$0xf]
          %v488 = vld [vmem:[%s312 + $0xc] sm:$0xf]
          %v489 = vld [vmem:[%s312 + $0x10] sm:$0xf]
          %v490 = vld [vmem:[%s312 + $0x14] sm:$0xf]
          %v491 = vld [vmem:[%s312 + $0x18] sm:$0xf]
          %v492 = vld [vmem:[%s312 + $0x1c] sm:$0xf]
          %v493 = vld [vmem:[%s312 + $0x20] sm:$0xf]
          %v494 = vld [vmem:[%s312 + $0x24] sm:$0xf]
          %v495 = vld [vmem:[%s312 + $0x28] sm:$0xf]
          %v496 = vld [vmem:[%s312 + $0x2c] sm:$0xf]
          %v497 = vld [vmem:[%s312 + $0x30] sm:$0xf]
          %v498 = vld [vmem:[%s312 + $0x34] sm:$0xf]
          %v499 = vld [vmem:[%s312 + $0x38] sm:$0xf]
          %v500 = vld [vmem:[%s312 + $0x3c] sm:$0xf]
          %v501 = vld [vmem:[%s356] sm:$0x1]
          %v503 = vlaneseq
          %v504 = vshrl.u32 %v503, 7
          %v505 = vsub.s32 0, %v504
          %v506 = vrot.slane %v501, %v505
          %v524 = vunpack.c.l.b16 %v485
          %v525 = vunpack.c.l.b16 %v486
          %v526 = vunpack.c.l.b16 %v487
          %v527 = vunpack.c.l.b16 %v488
          %v528 = vunpack.c.l.b16 %v489
          %v529 = vunpack.c.l.b16 %v490
          %v530 = vunpack.c.l.b16 %v491
          %v531 = vunpack.c.l.b16 %v492
          %v532 = vunpack.c.l.b16 %v493
          %v533 = vunpack.c.l.b16 %v494
          %v534 = vunpack.c.l.b16 %v495
          %v535 = vunpack.c.l.b16 %v496
          %v536 = vunpack.c.l.b16 %v497
          %v537 = vunpack.c.l.b16 %v498
          %v538 = vunpack.c.l.b16 %v499
          %v539 = vunpack.c.l.b16 %v500
          %v540 = vpack.c.b16 %v525, %v524
          %v541 = vpack.c.b16 %v527, %v526
          %v542 = vpack.c.b16 %v529, %v528
          %v543 = vpack.c.b16 %v531, %v530
          %v544 = vpack.c.b16 %v533, %v532
          %v545 = vpack.c.b16 %v535, %v534
          %v546 = vpack.c.b16 %v537, %v536
          %v547 = vpack.c.b16 %v539, %v538
          %556 = vmatprep.subr.bf16.mxu0 0
          %557 = vmatpush1.bf16.msra.mxu0 %v540
          %558 = vmatprep.subr.bf16.mxu0 0
          %559 = vmatpush1.bf16.msra.mxu0 %v541
          %560 = vmatprep.subr.bf16.mxu0 0
          %561 = vmatpush1.bf16.msra.mxu0 %v542
          %562 = vmatprep.subr.bf16.mxu0 0
          %563 = vmatpush1.bf16.msra.mxu0 %v543
          %564 = vmatprep.subr.bf16.mxu0 0
          %565 = vmatpush1.bf16.msra.mxu0 %v544
          %566 = vmatprep.subr.bf16.mxu0 0
          %567 = vmatpush1.bf16.msra.mxu0 %v545
          %568 = vmatprep.subr.bf16.mxu0 0
          %569 = vmatpush1.bf16.msra.mxu0 %v546
          %570 = vmatprep.subr.bf16.mxu0 0
          %571 = vmatpush1.bf16.msra.mxu0 %v547
          %572 = vmatprep.subr.bf16.mxu0 0
          %573 = vmatpush1.bf16.msra.mxu0 0
          %574 = vmatprep.subr.bf16.mxu0 0
          %575 = vmatpush1.bf16.msra.mxu0 0
          %576 = vmatprep.subr.bf16.mxu0 0
          %577 = vmatpush1.bf16.msra.mxu0 0
          %578 = vmatprep.subr.bf16.mxu0 0
          %579 = vmatpush1.bf16.msra.mxu0 0
          %580 = vmatprep.subr.bf16.mxu0 0
          %581 = vmatpush1.bf16.msra.mxu0 0
          %582 = vmatprep.subr.bf16.mxu0 0
          %583 = vmatpush1.bf16.msra.mxu0 0
          %584 = vmatprep.subr.bf16.mxu0 0
          %585 = vmatpush1.bf16.msra.mxu0 0
          %586 = vmatprep.subr.bf16.mxu0 0
          %587 = vmatpush1.bf16.msra.mxu0 0
          %588 = vmatprep.mubr.bf16.mxu0 0
          %589 = vmatmul.mubr.bf16.gmra.mrb[0].mxu0 %v484
          %v590 = vpop.f32.mrb[0].mxu0
          %v591 = vadd.f32 %v506, %v590
          %v592 = vpop.f32.mrb[0].mxu0
          %v593 = vpop.f32.mrb[0].mxu0
          %v594 = vpop.f32.mrb[0].mxu0
          %595 = vdwg.mxu0
          %596 = vst [vmem:[%s349] sm:$0xff] %v591
        $region60: #{_run_multihead.1} parent=39 // pred_fallthru
          _
        %s597 = sand.u32 %s186, 1
        %s598 = scalar_lea.sflag [#allocation5], %s597
        %s599 = sand.u32 %s186, 1
        %s600 = smul.addr %s599, 8
        %s601 = scalar_lea.vmem [#allocation9], %s600
        // Predicated region
        $region61: #{_run_multihead.1} parent=39 // pred_check
          %p602 = pneg %p196
        $region62: #{_run_multihead.1} parent=39 // pred_check_branch
          %604 = sbr.rel (%p602) target = $region64
        $region63: #{_run_multihead.1} parent=39 // pred_region
          %s606 = ssub.s32 128, 128
          %607 = vsyncadd %s598, %s606
          %s608 = sadd.s32 %s29, %s28
          %s609 = smul.addr %s608, 128
          %s610 = scalar_lea.hbm %s5, %s609
          %s612 = sshll.u32 %s601, 4
          %s613 = int_to_ptr.vmem [resolvable:$true] %s612
          %615 = dma.vmem_to_hbm [thread:$0]  %s613, 128, %s610, %s598
        $region64: #{_run_multihead.1} parent=39 // pred_fallthru
          _
      $region40: #{_run_multihead.1} parent=5 // pred_fallthru
        _
      %p616 = scmp.le.s32.totalorder 2, %s18
      // Predicated region
      $region65: #{_run_multihead.1} parent=5 // pred_check
        %p617 = pneg %p616
      $region66: #{_run_multihead.1} parent=5 // pred_check_branch
        %619 = sbr.rel (%p617) target = $region68
      $region67: #{_run_multihead.1} parent=5 // pred_region
        %s620 = ssub.s32 %s18, 2
        // Predicated region
        $region69: #{_run_multihead.1} parent=67 // pred_check
          %p621 = pneg %p202
        $region70: #{_run_multihead.1} parent=67 // pred_check_branch
          %623 = sbr.rel (%p621) target = $region72
        $region71: #{_run_multihead.1} parent=67 // pred_region
          %s624 = sand.u32 %s187, 1
          %s625 = scalar_lea.sflag [#allocation5], %s624
          %s626 = sand.u32 %s187, 1
          %s627 = smul.addr %s626, 8
          %s628 = scalar_lea.vmem [#allocation9], %s627
          %629 = dma.done %s625, 128
        $region72: #{_run_multihead.1} parent=67 // pred_fallthru
          _
      $region68: #{_run_multihead.1} parent=5 // pred_fallthru
        _
    $region6: #{_run_multihead.1} parent=1 // loop_footer
      %s22 = sadd.s32 1, %s18
    $region7: #{_run_multihead.1} parent=1 // loop_footer_branch
      %17 = sbr.rel target = $region3
    $region8: #{_run_multihead.1} parent=1 // loop_exit
      _
    %630 = vsyncpa [#allocation4], 1
    %s631 = scalar_lea.sflag [#allocation4], 1
    %632 = vsyncpa %s631, 1
    %633 = vsyncpa [#allocation7], 1
    %s634 = scalar_lea.sflag [#allocation7], 1
    %635 = vsyncpa %s634, 1
    %636 = vsyncpa [#allocation5], 1
    %s637 = scalar_lea.sflag [#allocation5], 1
    %638 = vsyncpa %s637, 1

</llo_original>
